<compile_context>
chip_gen: v5e
topology: v5e:2x2
jax: 0.10.0
libtpu: 0.0.40
codegen_flags: <defaults>
</compile_context>

<pallas_src>
import functools

import jax
import jax.numpy as jnp
from jax import lax
from jax.experimental import pallas as pl
from jax.experimental.pallas import tpu as pltpu


def _round_up(x, m):
    return (x + m - 1) // m * m


# ----------------------------------------------------------------------------
# Fused kernel:  feats = mean(act, HW) ; logits = feats @ W + b ;
#                out   = log_softmax(logits, axis=-1)
# act block: (TB, THW, C) ; accumulator: (TB, C) f32 VMEM scratch.
# ----------------------------------------------------------------------------
def _gap_linear_logsoftmax_kernel(act_ref, w_ref, b_ref, out_ref, acc_ref, *,
                                  hw_total, thw, chunk, inv_hw, needs_mask):
    hw_idx = pl.program_id(1)

    @pl.when(hw_idx == 0)
    def _init():
        acc_ref[...] = jnp.zeros_like(acc_ref)

    base = hw_idx * thw  # first global HW row covered by this block

    def accumulate(start, size):
        # Chunked sublane reduction: upcast only `size` (=8) rows at a time,
        # never the whole block, and accumulate in f32.
        blk = act_ref[:, pl.ds(start, size), :].astype(jnp.float32)  # (TB,size,C)
        if needs_mask:  # static: only emitted when the HW grid overhangs
            rows = lax.broadcasted_iota(jnp.int32, (1, size, 1), 1) + start + base
            blk = jnp.where(rows < hw_total, blk, 0.0)
        acc_ref[...] += jnp.sum(blk, axis=1)                         # (TB, C)

    nfull = thw // chunk
    rem = thw % chunk
    if nfull > 0:
        def body(j, carry):
            accumulate(pl.multiple_of(j * chunk, chunk), chunk)
            return carry
        lax.fori_loop(0, nfull, body, 0)
    if rem > 0:
        accumulate(nfull * chunk, rem)

    @pl.when(hw_idx == pl.num_programs(1) - 1)
    def _finish():
        # (TB, C) lane-dense feats feed the MXU directly (bf16 in, f32 acc).
        feats = (acc_ref[...] * inv_hw).astype(jnp.bfloat16)
        logits = jnp.dot(feats, w_ref[...],
                         preferred_element_type=jnp.float32) + b_ref[...]
        # Stable log_softmax on the padded class axis; padded classes carry a
        # -1e30 f32 bias so max/exp are unaffected.
        m = jnp.max(logits, axis=-1, keepdims=True)
        shifted = logits - m
        lse = jnp.log(jnp.sum(jnp.exp(shifted), axis=-1, keepdims=True))
        out_ref[...] = (shifted - lse).astype(out_ref.dtype)


# ----------------------------------------------------------------------------
# VMEM-budget-driven tile selection.
# ----------------------------------------------------------------------------
def _choose_tiles(B, HW, C, act_itemsize):
    try:
        vmem_cap = int(pltpu.get_tpu_info().vmem_capacity_bytes)
    except Exception:
        vmem_cap = 64 * 1024 * 1024  # conservative (v7x-sized) fallback
    # Double-buffered activation stream gets ~70% of VMEM (~22 MiB/buffer on
    # v7x's 64 MiB, ~45 MiB/buffer on v5e/v6e's 128 MiB).
    per_buf = int(vmem_cap * 0.35)
    row_bytes = HW * C * act_itemsize

    # Batch tile: multiple of 8 sublanes (or == B when tiny), capped so the
    # batch grid has >= 2 steps when B allows (keeps both v7x TCs busy).
    if B <= 8:
        tb_cap = B
    else:
        tb_cap = min(_round_up(pl.cdiv(B, 2), 8), _round_up(B, 8))

    max_tb = per_buf // max(row_bytes, 1)
    if max_tb >= tb_cap:
        tb, thw = tb_cap, HW
    elif max_tb >= 8:
        tb, thw = min(tb_cap, (max_tb // 8) * 8), HW
    else:
        # Activation row too large for a full-HW block: keep a small batch
        # tile and tile the HW (reduction) axis instead.
        tb = B if B <= 8 else 8
        thw = per_buf // max(tb * C * act_itemsize, 1)
        thw = max(8, (thw // 8) * 8)
        thw = min(thw, HW)
    return tb, thw, vmem_cap


def classifier_head(act_bhwc, lin_w, lin_b):
    """Fused GAP + Linear + log_softmax head.

    act_bhwc: (B, H, W, C) channels-last backbone activation (bf16 preferred;
              f32 is accepted and read directly — no extra cast pass).
    lin_w:    (num_classes, C)  — PyTorch nn.Linear weight layout.
    lin_b:    (num_classes,)
    Returns (B, num_classes) f32 log-probabilities.
    """
    B, H, W, C = act_bhwc.shape
    HW = H * W
    N = lin_w.shape[0]
    # Keep the class axis at 128 lanes (only grow if N > 128): the kernel is
    # activation-bandwidth bound, wider padding just adds output bytes.
    N_pad = _round_up(max(N, 128), 128)

    act = act_bhwc.reshape(B, HW, C)          # contiguous reshape: free
    itemsize = act.dtype.itemsize

    tb, thw, vmem_cap = _choose_tiles(B, HW, C, itemsize)
    n_b = pl.cdiv(B, tb)
    n_hw = pl.cdiv(HW, thw)
    needs_mask = (n_hw * thw) != HW           # static
    chunk = 8                                 # sublane chunk for the GAP

    # Zero-pad weight columns; padded classes get -1e30 f32 bias (keep f32 and
    # -1e30: casting to bf16 or using -inf could NaN the softmax).
    w_pad = jnp.zeros((C, N_pad), jnp.bfloat16).at[:, :N].set(
        lin_w.T.astype(jnp.bfloat16))
    b_pad = jnp.full((1, N_pad), -1e30, jnp.float32).at[0, :N].set(
        lin_b.astype(jnp.float32))

    act_blk_bytes = tb * thw * C * itemsize
    # Deeper pipelining only when blocks are small AND there are enough grid
    # steps to hide the extra DMA startup (v7x small-tile case).
    use_triple = act_blk_bytes < (16 << 20) and (n_b * n_hw) >= 3
    act_spec_kwargs = dict(pipeline_mode=pl.Buffered(3)) if use_triple else {}
    n_buf = 3 if use_triple else 2

    vmem_est = (n_buf * act_blk_bytes
                + 2 * tb * N_pad * 4                        # double-buffered out
                + C * N_pad * 2 + N_pad * 4                 # resident W + bias
                + max(tb, 8) * max(C, 128) * 4              # f32 GAP accumulator
                + 2 * max(tb, 8) * chunk * max(C, 128) * 4  # f32 chunk transients
                + (8 << 20))                                # headroom
    vmem_limit = int(max(32 << 20, min(vmem_est, vmem_cap - (2 << 20))))

    kernel = functools.partial(
        _gap_linear_logsoftmax_kernel,
        hw_total=HW, thw=thw, chunk=chunk, inv_hw=1.0 / HW,
        needs_mask=needs_mask)

    cost = pl.CostEstimate(
        flops=2 * B * C * N_pad + B * HW * C,
        transcendentals=B * N_pad + B,
        bytes_accessed=(B * HW * C * itemsize + C * N_pad * 2 + N_pad * 4
                        + B * N_pad * 4),
    )

    out = pl.pallas_call(
        kernel,
        out_shape=jax.ShapeDtypeStruct((B, N_pad), jnp.float32),
        grid=(n_b, n_hw),
        in_specs=[
            # streamed activation tiles (batch x HW)
            pl.BlockSpec((tb, thw, C), lambda b, h: (b, h, 0), **act_spec_kwargs),
            # tiny weight / bias stay VMEM-resident across the whole grid
            pl.BlockSpec((C, N_pad), lambda b, h: (0, 0)),
            pl.BlockSpec((1, N_pad), lambda b, h: (0, 0)),
        ],
        out_specs=pl.BlockSpec((tb, N_pad), lambda b, h: (b, 0)),
        scratch_shapes=[pltpu.VMEM((tb, C), jnp.float32)],   # GAP accumulator
        compiler_params=pltpu.CompilerParams(
            dimension_semantics=("parallel", "arbitrary"),
            vmem_limit_bytes=vmem_limit),
        cost_estimate=cost,
    )(act, w_pad, b_pad)

    # Uneven last batch block produced garbage rows beyond B (already dropped
    # by out_shape) and padded class lanes are sliced off here.
    return out[:, :N]


# ----------------------------------------------------------------------------
# Deterministic stand-in for the external backbone `model` (plain-JAX glue).
# Emits channels-last bf16 activations (cast fuses into the conv/ReLU epilogue)
# so the head kernel gets lane-dense channels with no extra HBM pass.
# ----------------------------------------------------------------------------
def _backbone_f32(x_nchw, conv_w_hwio):
    x = jnp.transpose(x_nchw, (0, 2, 3, 1))                  # NCHW -> NHWC
    y = lax.conv_general_dilated(
        x, conv_w_hwio, window_strides=(1, 1), padding="SAME",
        dimension_numbers=("NHWC", "HWIO", "NHWC"))
    return jnp.maximum(y, 0.0)                               # (B, H, W, C) f32


def standin_backbone(x_nchw, conv_w_hwio):
    return None, _backbone_f32(x_nchw, conv_w_hwio).astype(jnp.bfloat16)


def classifier_forward(x_nchw, params):
    _, act = standin_backbone(x_nchw, params["conv_w"])
    return classifier_head(act, params["lin_w"], params["lin_b"])


# ----------------------------------------------------------------------------
# Pure-JAX references for correctness checks.
# ----------------------------------------------------------------------------
def classifier_forward_ref_f32(x_nchw, params):
    """Full-precision reference (original semantics)."""
    act = _backbone_f32(x_nchw, params["conv_w"])
    feats = jnp.mean(act, axis=(1, 2))
    logits = feats @ params["lin_w"].T + params["lin_b"]
    return jax.nn.log_softmax(logits, axis=1)


def classifier_forward_ref_matched(x_nchw, params):
    """Reference matching the kernel's bf16-operand / f32-accumulate numerics."""
    _, act = standin_backbone(x_nchw, params["conv_w"])
    feats = jnp.mean(act.astype(jnp.float32), axis=(1, 2))
    logits = jnp.dot(feats.astype(jnp.bfloat16),
                     params["lin_w"].T.astype(jnp.bfloat16),
                     preferred_element_type=jnp.float32) + params["lin_b"]
    return jax.nn.log_softmax(logits, axis=1)


if __name__ == "__main__":
    key = jax.random.PRNGKey(0)
    k_in, k_conv, k_w, k_b = jax.random.split(key, 4)

    # Small shapes consistent with the module: image input (B, 3, im, im).
    B, C_in, im_size = 2, 3, 16
    C_feat = 32          # stand-in backbone output channels -> Linear in_channel
    num_classes = 10

    x = jax.random.normal(k_in, (B, C_in, im_size, im_size), jnp.float32)

    params = {
        "conv_w": 0.1 * jax.random.normal(k_conv, (3, 3, C_in, C_feat), jnp.float32),
        # PyTorch nn.Linear weight layout: (num_classes, in_channel).
        "lin_w": 0.05 * jax.random.normal(k_w, (num_classes, C_feat), jnp.float32),
        "lin_b": 0.01 * jax.random.normal(k_b, (num_classes,), jnp.float32),
    }

    out = jax.block_until_ready(classifier_forward(x, params))

    ref_q = classifier_forward_ref_matched(x, params)
    ref_f = classifier_forward_ref_f32(x, params)

    assert out.shape == (B, num_classes)
    assert jnp.allclose(out, ref_q, atol=5e-3, rtol=5e-3), "mismatch vs matched ref"
    assert jnp.allclose(out, ref_f, atol=2e-2, rtol=2e-2), "mismatch vs f32 ref"
    # log_softmax rows should sum (in prob space) to 1
    assert jnp.allclose(jnp.sum(jnp.exp(out), axis=1), 1.0, atol=1e-4)

    print("KERNEL_OK")
</pallas_src>

<mosaic_0001>
module attributes {stable_mosaic.version = 11 : i64} {
  func.func @_gap_linear_logsoftmax_kernel(%arg0: i32, %arg1: i32, %arg2: memref<2x256x32xbf16, #tpu.memory_space<vmem>>, %arg3: memref<32x128xbf16, #tpu.memory_space<vmem>>, %arg4: memref<1x128xf32, #tpu.memory_space<vmem>>, %arg5: memref<2x128xf32, #tpu.memory_space<vmem>>, %arg6: memref<2x32xf32, #tpu.memory_space<vmem>>) attributes {dimension_semantics = [#tpu.dimension_semantics<parallel>, #tpu.dimension_semantics<arbitrary>], iteration_bounds = array<i64: 1, 1>, scalar_prefetch = 0 : i64, scratch_operands = 1 : i64, tpu.core_type = #tpu.core_type<tc>, window_params = [{transform_indices = @transform_0, window_bounds = array<i64: 2, 256, 32>}, {pipeline_mode = #tpu.pipeline_mode<synchronous>, transform_indices = @transform_1, window_bounds = array<i64: 32, 128>}, {pipeline_mode = #tpu.pipeline_mode<synchronous>, transform_indices = @transform_2, window_bounds = array<i64: 1, 128>}, {transform_indices = @transform_3, window_bounds = array<i64: 2, 128>}]} {
    %c0_i32 = arith.constant 0 : i32
    %0 = arith.cmpi eq, %arg1, %c0_i32 : i32
    %1 = arith.extui %0 : i1 to i32
    %c0_i32_0 = arith.constant 0 : i32
    %2 = arith.cmpi ne, %1, %c0_i32_0 : i32
    scf.if %2 {
      %cst = arith.constant 0.000000e+00 : f32
      %7 = vector.broadcast %cst : f32 to vector<2x32xf32>
      %c0 = arith.constant 0 : index
      %c0_5 = arith.constant 0 : index
      %8 = vector.load %arg6[%c0, %c0_5] : memref<2x32xf32, #tpu.memory_space<vmem>>, vector<2x32xf32>
      tpu.vector_store %arg6[%c0, %c0_5], %7 {strides = array<i32>} : memref<2x32xf32, #tpu.memory_space<vmem>>, vector<2x32xf32>,
    } else {
    }
    %c0_i32_1 = arith.constant 0 : i32
    %c32_i32 = arith.constant 32 : i32
    %3 = arith.addi %c0_i32_1, %c32_i32 : i32
    %c1_i32 = arith.constant 1 : i32
    scf.for %arg7 = %c0_i32_1 to %3 step %c1_i32  : i32 {
      %c8_i32 = arith.constant 8 : i32
      %7 = arith.muli %arg7, %c8_i32 : i32
      %8 = tpu.assume_multiple %7, 8 : i32
      %c0 = arith.constant 0 : index
      %9 = arith.index_cast %8 : i32 to index
      %c0_5 = arith.constant 0 : index
      %10 = vector.load %arg2[%c0, %9, %c0_5] : memref<2x256x32xbf16, #tpu.memory_space<vmem>>, vector<2x8x32xbf16>
      %11 = arith.extf %10 : vector<2x8x32xbf16> to vector<2x8x32xf32>
      %c0_6 = arith.constant 0 : index
      %c0_7 = arith.constant 0 : index
      %12 = vector.load %arg6[%c0_6, %c0_7] : memref<2x32xf32, #tpu.memory_space<vmem>>, vector<2x32xf32>
      %cst = arith.constant dense<0.000000e+00> : vector<2x32xf32>
      %13 = vector.multi_reduction <add>, %11, %cst [1] : vector<2x8x32xf32> to vector<2x32xf32>
      %14 = arith.addf %12, %13 : vector<2x32xf32>
      %c0_8 = arith.constant 0 : index
      %c0_9 = arith.constant 0 : index
      %15 = vector.load %arg6[%c0_8, %c0_9] : memref<2x32xf32, #tpu.memory_space<vmem>>, vector<2x32xf32>
      tpu.vector_store %arg6[%c0_8, %c0_9], %14 {strides = array<i32>} : memref<2x32xf32, #tpu.memory_space<vmem>>, vector<2x32xf32>,
    }
    %c32_i32_2 = arith.constant 32 : i32
    %c0_i32_3 = arith.constant 0 : i32
    %4 = arith.cmpi eq, %arg1, %c0_i32_3 : i32
    %5 = arith.extui %4 : i1 to i32
    %c0_i32_4 = arith.constant 0 : i32
    %6 = arith.cmpi ne, %5, %c0_i32_4 : i32
    scf.if %6 {
      %c0 = arith.constant 0 : index
      %c0_5 = arith.constant 0 : index
      %7 = vector.load %arg6[%c0, %c0_5] : memref<2x32xf32, #tpu.memory_space<vmem>>, vector<2x32xf32>
      %cst = arith.constant 3.906250e-03 : f32
      %8 = vector.broadcast %cst : f32 to vector<2x32xf32>
      %9 = arith.mulf %7, %8 : vector<2x32xf32>
      %10 = arith.truncf %9 : vector<2x32xf32> to vector<2x32xbf16>
      %c0_6 = arith.constant 0 : index
      %c0_7 = arith.constant 0 : index
      %11 = vector.load %arg3[%c0_6, %c0_7] : memref<32x128xbf16, #tpu.memory_space<vmem>>, vector<32x128xbf16>
      %cst_8 = arith.constant dense<0.000000e+00> : vector<2x128xf32>
      %12 = tpu.matmul %10, %11, %cst_8 {dimension_numbers = #tpu.dot_dimension_numbers<[1], [0], [0], [1], [0, 0, 1, 1], [], []>} : vector<2x32xbf16>, vector<32x128xbf16>, vector<2x128xf32> -> vector<2x128xf32>
      %c0_9 = arith.constant 0 : index
      %c0_10 = arith.constant 0 : index
      %13 = vector.load %arg4[%c0_9, %c0_10] : memref<1x128xf32, #tpu.memory_space<vmem>>, vector<1x128xf32>
      %14 = vector.broadcast %13 : vector<1x128xf32> to vector<2x128xf32>
      %15 = arith.addf %12, %14 : vector<2x128xf32>
      %cst_11 = arith.constant dense<0xFF800000> : vector<2xf32>
      %16 = vector.multi_reduction <maximumf>, %15, %cst_11 [1] : vector<2x128xf32> to vector<2xf32>
      %17 = vector.shape_cast %16 : vector<2xf32> to vector<2x1xf32>
      %18 = vector.broadcast %17 : vector<2x1xf32> to vector<2x128xf32>
      %19 = arith.subf %15, %18 : vector<2x128xf32>
      %20 = math.exp %19 : vector<2x128xf32>
      %cst_12 = arith.constant dense<0.000000e+00> : vector<2xf32>
      %21 = vector.multi_reduction <add>, %20, %cst_12 [1] : vector<2x128xf32> to vector<2xf32>
      %22 = vector.shape_cast %21 : vector<2xf32> to vector<2x1xf32>
      %23 = math.log %22 : vector<2x1xf32>
      %24 = vector.broadcast %23 : vector<2x1xf32> to vector<2x128xf32>
      %25 = arith.subf %19, %24 : vector<2x128xf32>
      %c0_13 = arith.constant 0 : index
      %c0_14 = arith.constant 0 : index
      %26 = vector.load %arg5[%c0_13, %c0_14] : memref<2x128xf32, #tpu.memory_space<vmem>>, vector<2x128xf32>
      tpu.vector_store %arg5[%c0_13, %c0_14], %25 {strides = array<i32>} : memref<2x128xf32, #tpu.memory_space<vmem>>, vector<2x128xf32>,
    } else {
    }
    return
  }
  func.func @transform_0(%arg0: i32, %arg1: i32) -> (i32, i32, i32) {
    %c0_i32 = arith.constant 0 : i32
    %c0_i32_0 = arith.constant 0 : i32
    return %arg0, %arg1, %c0_i32 : i32, i32, i32
  }
  func.func @transform_1(%arg0: i32, %arg1: i32) -> (i32, i32) {
    %c0_i32 = arith.constant 0 : i32
    %c0_i32_0 = arith.constant 0 : i32
    %c0_i32_1 = arith.constant 0 : i32
    return %c0_i32, %c0_i32_0 : i32, i32
  }
  func.func @transform_2(%arg0: i32, %arg1: i32) -> (i32, i32) {
    %c0_i32 = arith.constant 0 : i32
    %c0_i32_0 = arith.constant 0 : i32
    %c0_i32_1 = arith.constant 0 : i32
    return %c0_i32, %c0_i32_0 : i32, i32
  }
  func.func @transform_3(%arg0: i32, %arg1: i32) -> (i32, i32) {
    %c0_i32 = arith.constant 0 : i32
    %c0_i32_0 = arith.constant 0 : i32
    return %arg0, %c0_i32 : i32, i32
  }
}

</mosaic_0001>

<llo_original>
// kernel: tpu_custom_call.1
$region0: #{tpu_custom_call.1}
  #allocation0 [shape = 'u32[]', space=smem, size = 0x4, offset = 0x4, fixed_abs, tag = 'smem constant byte address 0x4 - core index']
  #allocation1 [shape = 'u32[72,128]{1,0:T(1,128)}', space=vmem, size = 0x9000, scoped, tag = 'internal scratch']
  #allocation2 [shape = 'f32[2,32]{1,0:T(2,128)}', space=vmem, size = 0x400, scoped, tag = 'scratch operand']
  %s0 = inlined_call_operand.vmem [shape: bf16[2,256,32], index: 0, kind: input, shape index: {}]
  %s1 = inlined_call_operand.vmem [shape: bf16[32,128], index: 1, kind: input, shape index: {}]
  %s2 = inlined_call_operand.vmem [shape: f32[1,128], index: 2, kind: input, shape index: {}]
  %s3 = inlined_call_operand.hbm [shape: f32[2,128], index: 3, kind: output, shape index: {}]
  %s4 = sld [smem:[#allocation0]]
  $region37: #{tpu_custom_call.1} parent=0
    _
  %s6 = ssub.s32 1, %s4
  %s7 = scalar_select 0, %s6, %s4
  $region1: #{tpu_custom_call.1} parent=0
    #allocation3 [shape = 'u8[1024]{0}', space=vmem, size = 0x400, scoped, tag = 'output window, operand 0, single buffered']
    #allocation4 [shape = 's32[1]{0}', space=sflag, size = 0x4, scoped, tag = 'scoped memory for tpu_custom_call.1']
    %8 = vsyncpa [#allocation4], 0
    // Predicated region
    $region2: #{tpu_custom_call.1} parent=1 // pred_check
      _
    $region3: #{tpu_custom_call.1} parent=1 // pred_check_branch
      %10 = sbr.rel (0) target = $region5
    $region4: #{tpu_custom_call.1} parent=1 // pred_region
      _
    $region5: #{tpu_custom_call.1} parent=1 // pred_fallthru
      _
    // Predicated region
    $region6: #{tpu_custom_call.1} parent=1 // pred_check
      _
    $region7: #{tpu_custom_call.1} parent=1 // pred_check_branch
      %12 = sbr.rel (0) target = $region9
    $region8: #{tpu_custom_call.1} parent=1 // pred_region
      _
    $region9: #{tpu_custom_call.1} parent=1 // pred_fallthru
      _
    // Predicated region
    $region10: #{tpu_custom_call.1} parent=1 // pred_check
      _
    $region11: #{tpu_custom_call.1} parent=1 // pred_check_branch
      %14 = sbr.rel (0) target = $region13
    $region12: #{tpu_custom_call.1} parent=1 // pred_region
      _
    $region13: #{tpu_custom_call.1} parent=1 // pred_fallthru
      _
    %p16 = scmp.eq.s32.totalorder 0, 0
    // Predicated region
    $region14: #{tpu_custom_call.1} parent=1 // pred_check
      %p17 = pneg %p16
    $region15: #{tpu_custom_call.1} parent=1 // pred_check_branch
      %19 = sbr.rel (%p17) target = $region17
    $region16: #{tpu_custom_call.1} parent=1 // pred_region
      %vm20 = vcmask 254976
      %21 = vst.msk [vmem:[#allocation2] sm:$0x3] %vm20, 0.0
    $region17: #{tpu_custom_call.1} parent=1 // pred_fallthru
      _
    loop: start=0, step=1, limit=32
    $region18: #{tpu_custom_call.1} parent=1 // loop_pre_header
      _
    $region19: #{tpu_custom_call.1} parent=1 // loop_header
      %s23 = sphi 0, %s27
      %p24 = scmp.ge.s32.totalorder %s23, 32
    $region20: #{tpu_custom_call.1} parent=1 // loop_header_branch
      %26 = sbr.rel (%p24) target = $region24
    $region21: #{tpu_custom_call.1} parent=1 // loop_body
      %s28 = smul.u32 %s23, 8
      %s29 = sshra.s32 %s28, 3
      %s30 = sand.u32 %s28, 7
      %s31 = smul.addr %s29, 4
      %s32 = scalar_lea.vmem %s0, %s31
      %v33 = vld [vmem:[%s32] sm:$0xf]
      %v34 = vld [vmem:[%s32 + $0x80] sm:$0xf]
      %v35 = vunpack.c.l.bf16 %v33
      %v36 = vunpack.c.l.bf16 %v34
      %v37 = vld [vmem:[#allocation2] sm:$0x3]
      %vm38 = vcmask 261120
      %v39 = vsel %vm38, %v35, 0.0
      %v40 = vrot.slane %v39, 4
      %v41 = vadd.f32 %v39, %v40
      %v42 = vrot.slane %v41, 2
      %v43 = vadd.f32 %v41, %v42
      %v44 = vrot.slane %v43, 1
      %v45 = vadd.f32 %v43, %v44
      %v46 = vsel %vm38, %v36, 0.0
      %v47 = vrot.slane %v46, 4
      %v48 = vadd.f32 %v46, %v47
      %v49 = vrot.slane %v48, 2
      %v50 = vadd.f32 %v48, %v49
      %v51 = vrot.slane %v50, 1
      %v52 = vadd.f32 %v50, %v51
      %vm55 = vcmask 1041409
      %v56 = vsel %vm55, %v52, %v45
      %v58 = vadd.f32 %v37, %v56
      %vm59 = vcmask 254976
      %60 = vst.msk [vmem:[#allocation2] sm:$0x3] %vm59, %v58
    $region22: #{tpu_custom_call.1} parent=1 // loop_footer
      %s27 = sadd.s32 1, %s23
    $region23: #{tpu_custom_call.1} parent=1 // loop_footer_branch
      %22 = sbr.rel target = $region19
    $region24: #{tpu_custom_call.1} parent=1 // loop_exit
      _
    // Predicated region
    $region25: #{tpu_custom_call.1} parent=1 // pred_check
      %p61 = pneg %p16
    $region26: #{tpu_custom_call.1} parent=1 // pred_check_branch
      %63 = sbr.rel (%p61) target = $region28
    $region27: #{tpu_custom_call.1} parent=1 // pred_region
      %v64 = vld [vmem:[#allocation2] sm:$0x3]
      %v65 = vmul.f32 %v64, 0.00390625
      %v66 = vpack.c.bf16 %v65, %v65
      %v67 = vld [vmem:[%s1] sm:$0xf]
      %v68 = vld [vmem:[%s1 + $0x4] sm:$0xf]
      %v69 = vld [vmem:[%s1 + $0x8] sm:$0xf]
      %v70 = vld [vmem:[%s1 + $0xc] sm:$0xf]
      %v71 = vld [vmem:[%s2] sm:$0x1]
      %v73 = vperm.slane %v71, 0
      %v79 = vunpack.c.l.b16 %v67
      %v80 = vunpack.c.l.b16 %v68
      %v81 = vunpack.c.l.b16 %v69
      %v82 = vunpack.c.l.b16 %v70
      %v83 = vpack.c.b16 %v80, %v79
      %v84 = vpack.c.b16 %v82, %v81
      %vm87 = vcmask 261120
      %v89 = vsel %vm87, %v66, 0
      %91 = vmatpush.bf16.msra.mxu0 0
      %92 = vmatpush.bf16.msra.mxu0 0
      %93 = vmatpush.bf16.msra.mxu0 0
      %94 = vmatpush.bf16.msra.mxu0 0
      %95 = vmatpush.bf16.msra.mxu0 0
      %96 = vmatpush.bf16.msra.mxu0 0
      %97 = vmatpush.bf16.msra.mxu0 %v84
      %98 = vmatpush.bf16.msra.mxu0 %v83
      %99 = vmatmul.bf16.gmra.mxu0 %v89
      %v100 = vpop.f32.mrf.mxu0
      %v101 = vadd.f32 %v73, %v100
      %v102 = vpop.f32.mrf.mxu0
      %103 = vdwg.mxu0
      %vm104 = vcmask 1041408
      %v105 = vsel %vm104, %v101, -inf
      %106 = vmax.xlane.f32.xlu0 %v105
      %v107 = vpop.xlane.xlu0 %106
      %v108 = vsub.f32 %v101, %v107
      %v109 = vmul.f32 %v108, 1.442695
      %v110 = vpow.pop %v109
      %v111 = vsel %vm104, %v110, 0.0
      %112 = vadd.xlane.f32.xlu0 %v111
      %v113 = vpop.xlane.xlu0 %112
      %v114 = vlog2.pop %v113
      %v115 = vmul.f32 %v114, 0.6931472
      %v116 = vsub.f32 %v108, %v115
      %117 = vst [vmem:[#allocation3] sm:$0x3] %v116
    $region28: #{tpu_custom_call.1} parent=1 // pred_fallthru
      _
    // Predicated region
    $region29: #{tpu_custom_call.1} parent=1 // pred_check
      _
    $region30: #{tpu_custom_call.1} parent=1 // pred_check_branch
      %119 = sbr.rel (0) target = $region32
    $region31: #{tpu_custom_call.1} parent=1 // pred_region
      %121 = vsyncadd [#allocation4], 0
      %s123 = sshll.u32 [#allocation3], 4
      %s124 = int_to_ptr.vmem [resolvable:$true] %s123
      %s125 = sshll.u32 %s3, 4
      %s126 = int_to_ptr.hbm [resolvable:$true] %s125
      %128 = dma.vmem_to_hbm [thread:$0]  %s124, 32, %s126, [#allocation4]
    $region32: #{tpu_custom_call.1} parent=1 // pred_fallthru
      _
    // Predicated region
    $region33: #{tpu_custom_call.1} parent=1 // pred_check
      _
    $region34: #{tpu_custom_call.1} parent=1 // pred_check_branch
      %130 = sbr.rel (0) target = $region36
    $region35: #{tpu_custom_call.1} parent=1 // pred_region
      %132 = dma.done [#allocation4], 32
    $region36: #{tpu_custom_call.1} parent=1 // pred_fallthru
      _
    %133 = vsyncpa [#allocation4], 1

</llo_original>
